<compile_context>
chip_gen: v5e
topology: v5e:2x2
jax: 0.10.0
libtpu: 0.0.40
codegen_flags: <defaults>
</compile_context>

<pallas_src>
import functools

import jax
import jax.numpy as jnp
from jax import lax
from jax.experimental import pallas as pl
from jax.experimental.pallas import tpu as pltpu


NUM_SPLITS = 2                       # leading "parallel" grid axis (v7x: 2 TCs)
LANE = 128
MAX_TILE_N = 1024                    # rows per tile (amortizes ~0.35us/step overhead)
VMEM_TILE_BUDGET = 12 * 1024 * 1024  # bytes for the double-buffered logits stream


def _choose_tile_n(n_padded: int, c: int) -> int:
    lane_c = max(c, LANE)                        # last dim pads to 128 lanes in VMEM
    t = VMEM_TILE_BUDGET // (2 * lane_c * 4)     # 2 buffers (auto double-buffering)
    t = min(t, MAX_TILE_N, n_padded)
    t = max(8, (t // 8) * 8)                     # sublane granularity
    return t


def _focal_factor(q, gamma: float):
    """(1 - p)**gamma specialized at trace time. Returns None when the factor is 1."""
    if gamma == 0.0:
        return None
    if float(gamma).is_integer() and 1 <= int(gamma) <= 8:
        f = q
        for _ in range(int(gamma) - 1):
            f = f * q
        return f
    return jnp.power(q, gamma)


def focal_loss_kernel(logits_ref, target_ref, weight_ref, out_ref, *, gamma, n_valid):
    c_id = pl.program_id(0)          # split (TensorCore) index
    j_id = pl.program_id(1)          # tile index within the split

    @pl.when(j_id == 0)
    def _():
        out_ref[...] = jnp.zeros_like(out_ref)

    logits = logits_ref[...]                       # (T, C) f32
    tgt = target_ref[...]                          # (T, 1) i32
    w = weight_ref[...]                            # (1, C) f32
    T, C = logits.shape

    # One-hot mask of the target class (gather-free on TPU).
    col = lax.broadcasted_iota(jnp.int32, (T, C), 1)
    onehot = (col == tgt).astype(jnp.float32)      # (T, C)

    # Numerically-stable log-softmax evaluated at the target class.
    m = jnp.max(logits, axis=1, keepdims=True)             # (T, 1)
    z = logits - m                                          # (T, C)
    denom = jnp.sum(jnp.exp(z), axis=1, keepdims=True)      # (T, 1)
    z_t = jnp.sum(z * onehot, axis=1, keepdims=True)        # (T, 1)
    log_p = z_t - jnp.log(denom)                            # (T, 1)
    p = jnp.exp(log_p)                                      # (T, 1)

    # Per-sample class weight via the same one-hot mask.
    w_t = jnp.sum(w * onehot, axis=1, keepdims=True)        # (T, 1)

    q = jnp.maximum(1.0 - p, 0.0)    # clamp: avoids NaN from p rounding above 1
    factor = _focal_factor(q, gamma)
    loss = -w_t * log_p if factor is None else -w_t * factor * log_p   # (T, 1)

    # Mask rows past the true batch size (sublane padding / clamped overhang tiles).
    t_idx = c_id * pl.num_programs(1) + j_id       # un-clamped global tile index
    row = t_idx * T + lax.broadcasted_iota(jnp.int32, (T, 1), 0)
    loss = jnp.where(row < n_valid, loss, 0.0)

    out_ref[...] += jnp.sum(loss)                  # broadcast into the (1, 128) block


def focal_loss(logits, target, weight, gamma=0.0):
    """Pallas TPU focal loss. logits: (N, C), target: (N,) int, weight: (C,)."""
    N, C = logits.shape
    logits = logits.astype(jnp.float32)
    target = target.astype(jnp.int32)
    weight = weight.astype(jnp.float32)

    # Pad N up to a multiple of 8 (sublane granularity); at most 7 zero rows.
    n_pad = (-N) % 8
    if n_pad:
        logits = jnp.pad(logits, ((0, n_pad), (0, 0)))
        target = jnp.pad(target, ((0, n_pad),))
    n_padded = N + n_pad

    tile_n = _choose_tile_n(n_padded, C)
    num_tiles = (n_padded + tile_n - 1) // tile_n
    tiles_per_split = (num_tiles + NUM_SPLITS - 1) // NUM_SPLITS

    target2d = target.reshape(n_padded, 1)
    weight2d = weight.reshape(1, C)

    def row_map(c, j):
        t = c * tiles_per_split + j
        # Clamp overhang tiles into range; their rows are masked in the kernel.
        return (jnp.minimum(t, num_tiles - 1), 0)

    kernel = functools.partial(focal_loss_kernel, gamma=float(gamma), n_valid=N)

    cost = pl.CostEstimate(
        flops=int(8 * n_padded * C),
        transcendentals=int(n_padded * C),
        bytes_accessed=int(4 * n_padded * C + 4 * n_padded + 4 * C),
    )

    out = pl.pallas_call(
        kernel,
        out_shape=jax.ShapeDtypeStruct((1, NUM_SPLITS * LANE), jnp.float32),
        grid_spec=pltpu.PrefetchScalarGridSpec(
            num_scalar_prefetch=0,
            grid=(NUM_SPLITS, tiles_per_split),
            in_specs=[
                pl.BlockSpec((tile_n, C), row_map),            # logits tile
                pl.BlockSpec((tile_n, 1), row_map),            # target tile
                pl.BlockSpec((1, C), lambda c, j: (0, 0)),     # weight (resident)
            ],
            out_specs=pl.BlockSpec((1, LANE), lambda c, j: (0, c)),
        ),
        compiler_params=pltpu.CompilerParams(
            dimension_semantics=("parallel", "arbitrary"),
            vmem_limit_bytes=48 * 1024 * 1024,
        ),
        cost_estimate=cost,
    )(logits, target2d, weight2d)

    partials = out.reshape(NUM_SPLITS, LANE)[:, 0]   # one partial sum per split
    return jnp.sum(partials) / N


def focal_loss_ref(logits, target, weight, gamma=0.0):
    """Pure-JAX reference matching the PyTorch module."""
    log_p_all = jax.nn.log_softmax(logits, axis=1)
    log_p = jnp.take_along_axis(log_p_all, target.reshape(-1, 1), axis=1).reshape(-1)
    p = jnp.exp(log_p)
    loss = -weight[target] * (1.0 - p) ** gamma * log_p
    return loss.mean()


if __name__ == "__main__":
    key = jax.random.PRNGKey(0)

    # Case 1: typical usage — batch=8, classes=32, gamma=2 (integer fast path).
    N, C, gamma = 8, 32, 2.0
    k_logits, k_target, k_weight = jax.random.split(key, 3)
    logits = jax.random.normal(k_logits, (N, C), dtype=jnp.float32)
    target = jax.random.randint(k_target, (N,), 0, C, dtype=jnp.int32)
    weight = jax.random.uniform(k_weight, (C,), dtype=jnp.float32, minval=0.5, maxval=1.5)

    out = jax.block_until_ready(focal_loss(logits, target, weight, gamma=gamma))
    ref = focal_loss_ref(logits, target, weight, gamma=gamma)
    assert jnp.allclose(out, ref, rtol=1e-5, atol=1e-5), (out, ref)

    # Case 2: ragged batch (padding + row masking + clamped overhang tile) and
    # non-integer gamma (jnp.power path with clamp).
    N2, gamma2 = 13, 2.5
    logits2 = jax.random.normal(jax.random.PRNGKey(1), (N2, C), dtype=jnp.float32)
    target2 = jax.random.randint(jax.random.PRNGKey(2), (N2,), 0, C, dtype=jnp.int32)
    out2 = jax.block_until_ready(focal_loss(logits2, target2, weight, gamma=gamma2))
    ref2 = focal_loss_ref(logits2, target2, weight, gamma=gamma2)
    assert jnp.allclose(out2, ref2, rtol=1e-5, atol=1e-5), (out2, ref2)

    # Case 3: gamma = 0 (module default) — focal factor folded away at trace time.
    out3 = jax.block_until_ready(focal_loss(logits, target, weight, gamma=0.0))
    ref3 = focal_loss_ref(logits, target, weight, gamma=0.0)
    assert jnp.allclose(out3, ref3, rtol=1e-5, atol=1e-5), (out3, ref3)

    print("KERNEL_OK")
</pallas_src>

<mosaic_0001>
module attributes {stable_mosaic.version = 11 : i64} {
  func.func @focal_loss_kernel(%arg0: i32, %arg1: i32, %arg2: memref<8x32xf32, #tpu.memory_space<vmem>>, %arg3: memref<8x1xi32, #tpu.memory_space<vmem>>, %arg4: memref<1x32xf32, #tpu.memory_space<vmem>>, %arg5: memref<1x128xf32, #tpu.memory_space<vmem>>) attributes {dimension_semantics = [#tpu.dimension_semantics<parallel>, #tpu.dimension_semantics<arbitrary>], iteration_bounds = array<i64: 2, 1>, scalar_prefetch = 0 : i64, scratch_operands = 0 : i64, tpu.core_type = #tpu.core_type<tc>, window_params = [{transform_indices = @transform_0, window_bounds = array<i64: 8, 32>}, {transform_indices = @transform_1, window_bounds = array<i64: 8, 1>}, {pipeline_mode = #tpu.pipeline_mode<synchronous>, transform_indices = @transform_2, window_bounds = array<i64: 1, 32>}, {transform_indices = @transform_3, window_bounds = array<i64: 1, 128>}]} {
    %c0_i32 = arith.constant 0 : i32
    %0 = arith.cmpi eq, %arg1, %c0_i32 : i32
    %1 = arith.extui %0 : i1 to i32
    %c0_i32_0 = arith.constant 0 : i32
    %2 = arith.cmpi ne, %1, %c0_i32_0 : i32
    scf.if %2 {
      %cst_19 = arith.constant 0.000000e+00 : f32
      %55 = vector.broadcast %cst_19 : f32 to vector<1x128xf32>
      %c0_20 = arith.constant 0 : index
      %c0_21 = arith.constant 0 : index
      %56 = vector.load %arg5[%c0_20, %c0_21] : memref<1x128xf32, #tpu.memory_space<vmem>>, vector<1x128xf32>
      tpu.vector_store %arg5[%c0_20, %c0_21], %55 {strides = array<i32>} : memref<1x128xf32, #tpu.memory_space<vmem>>, vector<1x128xf32>,
    } else {
    }
    %c0 = arith.constant 0 : index
    %c0_1 = arith.constant 0 : index
    %3 = vector.load %arg2[%c0, %c0_1] : memref<8x32xf32, #tpu.memory_space<vmem>>, vector<8x32xf32>
    %c0_2 = arith.constant 0 : index
    %c0_3 = arith.constant 0 : index
    %4 = vector.load %arg3[%c0_2, %c0_3] : memref<8x1xi32, #tpu.memory_space<vmem>>, vector<8x1xi32>
    %c0_4 = arith.constant 0 : index
    %c0_5 = arith.constant 0 : index
    %5 = vector.load %arg4[%c0_4, %c0_5] : memref<1x32xf32, #tpu.memory_space<vmem>>, vector<1x32xf32>
    %6 = tpu.iota {dimensions = array<i32: 1>} : vector<8x32xi32>
    %7 = vector.broadcast %4 : vector<8x1xi32> to vector<8x32xi32>
    %8 = arith.cmpi eq, %6, %7 : vector<8x32xi32>
    %9 = arith.extui %8 : vector<8x32xi1> to vector<8x32xi32>
    %10 = arith.sitofp %9 : vector<8x32xi32> to vector<8x32xf32>
    %cst = arith.constant dense<0xFF800000> : vector<8xf32>
    %11 = vector.multi_reduction <maximumf>, %3, %cst [1] : vector<8x32xf32> to vector<8xf32>
    %12 = vector.shape_cast %11 : vector<8xf32> to vector<8x1xf32>
    %13 = vector.broadcast %12 : vector<8x1xf32> to vector<8x32xf32>
    %14 = arith.subf %3, %13 : vector<8x32xf32>
    %15 = math.exp %14 : vector<8x32xf32>
    %cst_6 = arith.constant dense<0.000000e+00> : vector<8xf32>
    %16 = vector.multi_reduction <add>, %15, %cst_6 [1] : vector<8x32xf32> to vector<8xf32>
    %17 = vector.shape_cast %16 : vector<8xf32> to vector<8x1xf32>
    %18 = arith.mulf %14, %10 : vector<8x32xf32>
    %cst_7 = arith.constant dense<0.000000e+00> : vector<8xf32>
    %19 = vector.multi_reduction <add>, %18, %cst_7 [1] : vector<8x32xf32> to vector<8xf32>
    %20 = vector.shape_cast %19 : vector<8xf32> to vector<8x1xf32>
    %21 = math.log %17 : vector<8x1xf32>
    %22 = arith.subf %20, %21 : vector<8x1xf32>
    %23 = math.exp %22 : vector<8x1xf32>
    %24 = vector.broadcast %5 : vector<1x32xf32> to vector<8x32xf32>
    %25 = arith.mulf %24, %10 : vector<8x32xf32>
    %cst_8 = arith.constant dense<0.000000e+00> : vector<8xf32>
    %26 = vector.multi_reduction <add>, %25, %cst_8 [1] : vector<8x32xf32> to vector<8xf32>
    %27 = vector.shape_cast %26 : vector<8xf32> to vector<8x1xf32>
    %cst_9 = arith.constant 1.000000e+00 : f32
    %28 = vector.broadcast %cst_9 : f32 to vector<8x1xf32>
    %29 = arith.subf %28, %23 : vector<8x1xf32>
    %cst_10 = arith.constant 0.000000e+00 : f32
    %30 = vector.broadcast %cst_10 : f32 to vector<8x1xf32>
    %31 = arith.maximumf %29, %30 : vector<8x1xf32>
    %32 = arith.mulf %31, %31 : vector<8x1xf32>
    %cst_11 = arith.constant 0.000000e+00 : f32
    %33 = vector.broadcast %cst_11 : f32 to vector<8x1xf32>
    %34 = arith.subf %33, %27 : vector<8x1xf32>
    %35 = arith.mulf %34, %32 : vector<8x1xf32>
    %36 = arith.mulf %35, %22 : vector<8x1xf32>
    %c1_i32 = arith.constant 1 : i32
    %37 = arith.muli %arg0, %c1_i32 : i32
    %38 = arith.addi %37, %arg1 : i32
    %c8_i32 = arith.constant 8 : i32
    %39 = arith.muli %38, %c8_i32 : i32
    %40 = tpu.iota {dimensions = array<i32: 0>} : vector<8x1xi32>
    %41 = vector.broadcast %39 : i32 to vector<8x1xi32>
    %42 = arith.addi %41, %40 : vector<8x1xi32>
    %c8_i32_12 = arith.constant 8 : i32
    %43 = vector.broadcast %c8_i32_12 : i32 to vector<8x1xi32>
    %44 = arith.cmpi slt, %42, %43 : vector<8x1xi32>
    %cst_13 = arith.constant 0.000000e+00 : f32
    %45 = vector.broadcast %cst_13 : f32 to vector<8x1xf32>
    %46 = arith.select %44, %36, %45 : vector<8x1xi1>, vector<8x1xf32>
    %c0_14 = arith.constant 0 : index
    %c0_15 = arith.constant 0 : index
    %47 = vector.load %arg5[%c0_14, %c0_15] : memref<1x128xf32, #tpu.memory_space<vmem>>, vector<1x128xf32>
    %48 = vector.shape_cast %46 : vector<8x1xf32> to vector<1x8x1xf32>
    %cst_16 = arith.constant dense<0.000000e+00> : vector<1xf32>
    %49 = vector.multi_reduction <add>, %48, %cst_16 [1, 2] : vector<1x8x1xf32> to vector<1xf32>
    %50 = vector.shape_cast %49 : vector<1xf32> to vector<1x1x1xf32>
    %51 = vector.extract %50[0, 0, 0] : f32 from vector<1x1x1xf32>
    %52 = vector.broadcast %51 : f32 to vector<1x128xf32>
    %53 = arith.addf %47, %52 : vector<1x128xf32>
    %c0_17 = arith.constant 0 : index
    %c0_18 = arith.constant 0 : index
    %54 = vector.load %arg5[%c0_17, %c0_18] : memref<1x128xf32, #tpu.memory_space<vmem>>, vector<1x128xf32>
    tpu.vector_store %arg5[%c0_17, %c0_18], %53 {strides = array<i32>} : memref<1x128xf32, #tpu.memory_space<vmem>>, vector<1x128xf32>,
    return
  }
  func.func @transform_0(%arg0: i32, %arg1: i32) -> (i32, i32) {
    %c1_i32 = arith.constant 1 : i32
    %0 = arith.muli %arg0, %c1_i32 : i32
    %1 = arith.addi %0, %arg1 : i32
    %c0_i32 = arith.constant 0 : i32
    %2 = arith.minsi %1, %c0_i32 : i32
    %c0_i32_0 = arith.constant 0 : i32
    %c0_i32_1 = arith.constant 0 : i32
    return %2, %c0_i32_0 : i32, i32
  }
  func.func @transform_1(%arg0: i32, %arg1: i32) -> (i32, i32) {
    %c1_i32 = arith.constant 1 : i32
    %0 = arith.muli %arg0, %c1_i32 : i32
    %1 = arith.addi %0, %arg1 : i32
    %c0_i32 = arith.constant 0 : i32
    %2 = arith.minsi %1, %c0_i32 : i32
    %c0_i32_0 = arith.constant 0 : i32
    %c0_i32_1 = arith.constant 0 : i32
    return %2, %c0_i32_0 : i32, i32
  }
  func.func @transform_2(%arg0: i32, %arg1: i32) -> (i32, i32) {
    %c0_i32 = arith.constant 0 : i32
    %c0_i32_0 = arith.constant 0 : i32
    %c0_i32_1 = arith.constant 0 : i32
    return %c0_i32, %c0_i32_0 : i32, i32
  }
  func.func @transform_3(%arg0: i32, %arg1: i32) -> (i32, i32) {
    %c0_i32 = arith.constant 0 : i32
    %c0_i32_0 = arith.constant 0 : i32
    return %c0_i32, %arg0 : i32, i32
  }
}

</mosaic_0001>

<llo_original>
// kernel: tpu_custom_call.1
$region0: #{tpu_custom_call.1}
  #allocation0 [shape = 'u32[]', space=smem, size = 0x4, offset = 0x4, fixed_abs, tag = 'smem constant byte address 0x4 - core index']
  #allocation1 [shape = 'u32[72,128]{1,0:T(1,128)}', space=vmem, size = 0x9000, scoped, tag = 'internal scratch']
  %s0 = inlined_call_operand.vmem [shape: f32[8,32], index: 0, kind: input, shape index: {}]
  %s1 = inlined_call_operand.vmem [shape: s32[8,1], index: 1, kind: input, shape index: {}]
  %s2 = inlined_call_operand.vmem [shape: f32[1,32], index: 2, kind: input, shape index: {}]
  %s3 = inlined_call_operand.hbm [shape: f32[1,256], index: 3, kind: output, shape index: {}]
  %s4 = sld [smem:[#allocation0]]
  $region49: #{tpu_custom_call.1} parent=0
    _
  %s6 = ssub.s32 1, %s4
  %s7 = scalar_select 0, %s6, %s4
  $region1: #{tpu_custom_call.1} parent=0
    #allocation2 [shape = 'u8[1024]{0}', space=vmem, size = 0x400, scoped, tag = 'output window, operand 0']
    #allocation3 [shape = 's32[2]{0}', space=sflag, size = 0x8, scoped, tag = 'scoped memory for tpu_custom_call.1']
    %8 = vsyncpa [#allocation3], 0
    %s9 = scalar_lea.sflag [#allocation3], 1
    %10 = vsyncpa %s9, 0
    loop: start=0, step=1, limit=4
    $region2: #{tpu_custom_call.1} parent=1 // loop_pre_header
      _
    $region3: #{tpu_custom_call.1} parent=1 // loop_header
      %s12 = sphi 0, %s16
      %p13 = scmp.ge.s32.totalorder %s12, 4
      %s19 = sphi 0, %s31
      %s20 = sphi 0, %s27
      %s21 = sphi 0, %s19
      %s22 = sphi 0, %s20
      %s23 = sphi 0, %s21
      %s24 = sphi 0, %s22
      %s40 = sphi 0, %s42
      %s43 = sphi 0, %s40
      %s44 = sphi 0, %s43
      %s60 = sphi 0, %s44
      %s72 = sphi 0, %s74
      %s75 = sphi 0, %s72
      %s76 = sphi 0, %s75
      %s92 = sphi 0, %s76
      %s96 = sphi 0, %s96
      %s98 = sphi 0, %s96
      %s99 = sphi 0, %s98
      %s113 = sphi 0, %s99
      %s119 = sphi 0, %s121
      %s122 = sphi 0, %s119
      %s123 = sphi 0, %s122
      %s139 = sphi 0, %s123
    $region4: #{tpu_custom_call.1} parent=1 // loop_header_branch
      %15 = sbr.rel (%p13) target = $region8
    $region5: #{tpu_custom_call.1} parent=1 // loop_body
      %s17 = ssub.s32 %s12, 1
      %s18 = ssub.s32 %s12, 2
      %s25 = sadd.s32 1, %s20
      %p26 = scmp.ge.s32.totalorder %s25, 1
      %s27 = scalar_select %p26, 0, %s25
      %s28 = sadd.s32 1, %s19
      %s29 = scalar_select %p26, %s28, %s19
      %p30 = scmp.ge.s32.totalorder %s29, 2
      %s31 = scalar_select %p30, 0, %s29
      %s32 = sadd.s32 %s19, %s20
      %p33 = scmp.lt.s32.totalorder %s32, 0
      %s34 = scalar_select %p33, %s32, 0
      %s35 = sadd.s32 %s31, %s27
      %p36 = scmp.lt.s32.totalorder %s35, 0
      %s37 = scalar_select %p36, %s35, 0
      %s38 = ssub.s32 %s34, %s37
      %p39 = scmp.eq.s32.totalorder %s38, 0
      %s41 = sadd.s32 %s40, 1
      %s42 = scalar_select %p39, %s40, %s41
      %p45 = pneg %p39
      %p46 = scmp.eq.s32.totalorder %s12, 1
      %p47 = por %p45, %p46
      %p48 = scmp.ne.s32.totalorder %s40, %s43
      %p49 = scmp.eq.s32.totalorder %s12, 0
      %p50 = por %p48, %p49
      %p51 = scmp.ne.s32.totalorder %s40, %s43
      %p52 = scmp.eq.s32.totalorder %s17, 1
      %p53 = por %p51, %p52
      %p54 = scmp.ne.s32.totalorder %s43, %s44
      %p55 = scmp.eq.s32.totalorder %s17, 0
      %p56 = por %p54, %p55
      %p57 = scmp.ne.s32.totalorder %s43, %s44
      %p58 = scmp.eq.s32.totalorder %s18, 1
      %p59 = por %p57, %p58
      %p61 = scmp.ne.s32.totalorder %s44, %s60
      %p62 = scmp.eq.s32.totalorder %s18, 0
      %p63 = por %p61, %p62
      %s64 = sadd.s32 %s19, %s20
      %p65 = scmp.lt.s32.totalorder %s64, 0
      %s66 = scalar_select %p65, %s64, 0
      %s67 = sadd.s32 %s31, %s27
      %p68 = scmp.lt.s32.totalorder %s67, 0
      %s69 = scalar_select %p68, %s67, 0
      %s70 = ssub.s32 %s66, %s69
      %p71 = scmp.eq.s32.totalorder %s70, 0
      %s73 = sadd.s32 %s72, 1
      %s74 = scalar_select %p71, %s72, %s73
      %p77 = pneg %p71
      %p78 = scmp.eq.s32.totalorder %s12, 1
      %p79 = por %p77, %p78
      %p80 = scmp.ne.s32.totalorder %s72, %s75
      %p81 = scmp.eq.s32.totalorder %s12, 0
      %p82 = por %p80, %p81
      %p83 = scmp.ne.s32.totalorder %s72, %s75
      %p84 = scmp.eq.s32.totalorder %s17, 1
      %p85 = por %p83, %p84
      %p86 = scmp.ne.s32.totalorder %s75, %s76
      %p87 = scmp.eq.s32.totalorder %s17, 0
      %p88 = por %p86, %p87
      %p89 = scmp.ne.s32.totalorder %s75, %s76
      %p90 = scmp.eq.s32.totalorder %s18, 1
      %p91 = por %p89, %p90
      %p93 = scmp.ne.s32.totalorder %s76, %s92
      %p94 = scmp.eq.s32.totalorder %s18, 0
      %p95 = por %p93, %p94
      %s97 = sadd.s32 %s96, 1
      %p100 = scmp.eq.s32.totalorder %s12, 1
      %p101 = scmp.ne.s32.totalorder %s96, %s98
      %p102 = scmp.eq.s32.totalorder %s12, 0
      %p103 = por %p101, %p102
      %p104 = scmp.ne.s32.totalorder %s96, %s98
      %p105 = scmp.eq.s32.totalorder %s17, 1
      %p106 = por %p104, %p105
      %p107 = scmp.ne.s32.totalorder %s98, %s99
      %p108 = scmp.eq.s32.totalorder %s17, 0
      %p109 = por %p107, %p108
      %p110 = scmp.ne.s32.totalorder %s98, %s99
      %p111 = scmp.eq.s32.totalorder %s18, 1
      %p112 = por %p110, %p111
      %p114 = scmp.ne.s32.totalorder %s99, %s113
      %p115 = scmp.eq.s32.totalorder %s18, 0
      %p116 = por %p114, %p115
      %s117 = ssub.s32 %s19, %s31
      %p118 = scmp.eq.s32.totalorder %s117, 0
      %s120 = sadd.s32 %s119, 1
      %s121 = scalar_select %p118, %s119, %s120
      %p124 = pneg %p118
      %p125 = scmp.eq.s32.totalorder %s12, 1
      %p126 = por %p124, %p125
      %p127 = scmp.ne.s32.totalorder %s119, %s122
      %p128 = scmp.eq.s32.totalorder %s12, 0
      %p129 = por %p127, %p128
      %p130 = scmp.ne.s32.totalorder %s119, %s122
      %p131 = scmp.eq.s32.totalorder %s17, 1
      %p132 = por %p130, %p131
      %p133 = scmp.ne.s32.totalorder %s122, %s123
      %p134 = scmp.eq.s32.totalorder %s17, 0
      %p135 = por %p133, %p134
      %p136 = scmp.ne.s32.totalorder %s122, %s123
      %p137 = scmp.eq.s32.totalorder %s18, 1
      %p138 = por %p136, %p137
      %p140 = scmp.ne.s32.totalorder %s123, %s139
      %p141 = scmp.eq.s32.totalorder %s18, 0
      %p142 = por %p140, %p141
      %p143 = scmp.le.s32.totalorder 1, %s12
      %p144 = scmp.lt.s32.totalorder %s12, 3
      %p145 = pnand %p143, %p144
      %p146 = pneg %p145
      // Predicated region
      $region9: #{tpu_custom_call.1} parent=5 // pred_check
        _
      $region10: #{tpu_custom_call.1} parent=5 // pred_check_branch
        %148 = sbr.rel (%p145) target = $region12
      $region11: #{tpu_custom_call.1} parent=5 // pred_region
        %s149 = ssub.s32 %s12, 1
        // Predicated region
        $region13: #{tpu_custom_call.1} parent=11 // pred_check
          %p150 = pneg %p109
        $region14: #{tpu_custom_call.1} parent=11 // pred_check_branch
          %152 = sbr.rel (%p150) target = $region16
        $region15: #{tpu_custom_call.1} parent=11 // pred_region
          _
        $region16: #{tpu_custom_call.1} parent=11 // pred_fallthru
          _
      $region12: #{tpu_custom_call.1} parent=5 // pred_fallthru
        _
      %p153 = scmp.lt.s32.totalorder %s12, 2
      // Predicated region
      $region17: #{tpu_custom_call.1} parent=5 // pred_check
        %p154 = pneg %p153
      $region18: #{tpu_custom_call.1} parent=5 // pred_check_branch
        %156 = sbr.rel (%p154) target = $region20
      $region19: #{tpu_custom_call.1} parent=5 // pred_region
        // Predicated region
        $region21: #{tpu_custom_call.1} parent=19 // pred_check
          %p157 = pneg %p50
        $region22: #{tpu_custom_call.1} parent=19 // pred_check_branch
          %159 = sbr.rel (%p157) target = $region24
        $region23: #{tpu_custom_call.1} parent=19 // pred_region
          %s160 = sadd.s32 %s19, %s20
          %p161 = scmp.lt.s32.totalorder %s160, 0
          %s162 = scalar_select %p161, %s160, 0
          %p163 = scmp.lt.s32.totalorder %s162, 0
          %s164 = scalar_select %p163, %s162, 0
          %s165 = smul.addr %s164, 8
          %s166 = scalar_lea.vmem %s0, %s165
          %s167 = sadd.s32 %s19, %s20
          %p168 = scmp.lt.s32.totalorder %s167, 0
          %s169 = scalar_select %p168, %s167, 0
        $region24: #{tpu_custom_call.1} parent=19 // pred_fallthru
          _
        // Predicated region
        $region25: #{tpu_custom_call.1} parent=19 // pred_check
          %p170 = pneg %p82
        $region26: #{tpu_custom_call.1} parent=19 // pred_check_branch
          %172 = sbr.rel (%p170) target = $region28
        $region27: #{tpu_custom_call.1} parent=19 // pred_region
          %s173 = sadd.s32 %s19, %s20
          %p174 = scmp.lt.s32.totalorder %s173, 0
          %s175 = scalar_select %p174, %s173, 0
          %p176 = scmp.lt.s32.totalorder %s175, 0
          %s177 = scalar_select %p176, %s175, 0
          %s178 = smul.addr %s177, 8
          %s179 = scalar_lea.vmem %s1, %s178
          %s180 = sadd.s32 %s19, %s20
          %p181 = scmp.lt.s32.totalorder %s180, 0
          %s182 = scalar_select %p181, %s180, 0
        $region28: #{tpu_custom_call.1} parent=19 // pred_fallthru
          _
      $region20: #{tpu_custom_call.1} parent=5 // pred_fallthru
        _
      %p183 = scmp.le.s32.totalorder 1, %s12
      %p184 = scmp.lt.s32.totalorder %s12, 3
      %p185 = pnand %p183, %p184
      %p186 = pneg %p185
      // Predicated region
      $region29: #{tpu_custom_call.1} parent=5 // pred_check
        _
      $region30: #{tpu_custom_call.1} parent=5 // pred_check_branch
        %188 = sbr.rel (%p185) target = $region32
      $region31: #{tpu_custom_call.1} parent=5 // pred_region
        %s189 = ssub.s32 %s12, 1
        %s190 = sadd.s32 %s21, %s22
        %p191 = scmp.lt.s32.totalorder %s190, 0
        %s192 = scalar_select %p191, %s190, 0
        %p193 = scmp.lt.s32.totalorder %s192, 0
        %s194 = scalar_select %p193, %s192, 0
        %s195 = smul.addr %s194, 8
        %s196 = scalar_lea.vmem %s0, %s195
        %p197 = pneg %p56
        %p198 = pneg %p53
        %s199 = sadd.s32 %s21, %s22
        %p200 = scmp.lt.s32.totalorder %s199, 0
        %s201 = scalar_select %p200, %s199, 0
        %p202 = scmp.lt.s32.totalorder %s201, 0
        %s203 = scalar_select %p202, %s201, 0
        %s204 = smul.addr %s203, 8
        %s205 = scalar_lea.vmem %s1, %s204
        %p206 = pneg %p88
        %p207 = pneg %p85
        %p208 = pneg %p109
        %p209 = pneg %p106
        %p210 = pneg %p135
        %p211 = pneg %p132
        %s212 = sand.u32 %s122, 1
        %s213 = scalar_lea.sflag [#allocation3], %s212
        %s214 = sand.u32 %s122, 1
        %s215 = scalar_lea.vmem [#allocation2], %s214
        %s216 = sadd.s32 %s21, %s22
        %p217 = scmp.lt.s32.totalorder %s216, 0
        %s218 = scalar_select %p217, %s216, 0
        %p219 = scmp.lt.s32.totalorder %s218, 0
        %s220 = scalar_select %p219, %s218, 0
        %s221 = smul.addr %s220, 8
        %s222 = scalar_lea.vmem %s0, %s221
        %s223 = sadd.s32 %s21, %s22
        %p224 = scmp.lt.s32.totalorder %s223, 0
        %s225 = scalar_select %p224, %s223, 0
        %s226 = sadd.s32 %s21, %s22
        %p227 = scmp.lt.s32.totalorder %s226, 0
        %s228 = scalar_select %p227, %s226, 0
        %p229 = scmp.lt.s32.totalorder %s228, 0
        %s230 = scalar_select %p229, %s228, 0
        %s231 = smul.addr %s230, 8
        %s232 = scalar_lea.vmem %s1, %s231
        %s233 = sadd.s32 %s21, %s22
        %p234 = scmp.lt.s32.totalorder %s233, 0
        %s235 = scalar_select %p234, %s233, 0
        %p236 = scmp.eq.s32.totalorder %s22, 0
        // Predicated region
        $region33: #{tpu_custom_call.1} parent=31 // pred_check
          %p237 = pneg %p236
        $region34: #{tpu_custom_call.1} parent=31 // pred_check_branch
          %239 = sbr.rel (%p237) target = $region36
        $region35: #{tpu_custom_call.1} parent=31 // pred_region
          %240 = vst [vmem:[%s215] sm:$0x1] 0.0
        $region36: #{tpu_custom_call.1} parent=31 // pred_fallthru
          _
        %v241 = vld [vmem:[%s222] sm:$0xff]
        %v242 = vld [vmem:[%s232] sm:$0xff]
        %v243 = vld [vmem:[%s2] sm:$0x1]
        %v244 = vlaneseq
        %v245 = vand.u32 %v244, 127
        %246 = vset.pattern.permute.xlu0 0
        %247 = vperm.xlu0 %246, %v242
        %v248 = vpop.permute.xlu0 %247
        %vm249 = vcmp.eq.s32.totalorder %v245, %v248
        %v250 = vsel %vm249, 1, 0
        %v251 = vcvt.s32.f32 %v250
        %vm252 = vcmask 261120
        %v253 = vsel %vm252, %v241, -inf
        %254 = vmax.xlane.f32.xlu0 %v253
        %v255 = vpop.xlane.xlu0 %254
        %v256 = vsub.f32 %v241, %v255
        %v257 = vmul.f32 %v256, 1.442695
        %v258 = vpow.pop %v257
        %v259 = vsel %vm252, %v258, 0.0
        %260 = vadd.xlane.f32.xlu0 %v259
        %v261 = vpop.xlane.xlu0 %260
        %v262 = vmul.f32 %v256, %v251
        %v263 = vsel %vm252, %v262, 0.0
        %264 = vadd.xlane.f32.xlu0 %v263
        %v265 = vpop.xlane.xlu0 %264
        %v266 = vlog2.pop %v261
        %v267 = vmul.f32 %v266, 0.6931472
        %v268 = vsub.f32 %v265, %v267
        %v269 = vmul.f32 %v268, 1.442695
        %v270 = vpow.pop %v269
        %v272 = vperm.slane %v243, 0
        %v274 = vmul.f32 %v272, %v251
        %v275 = vsel %vm252, %v274, 0.0
        %276 = vadd.xlane.f32.xlu0 %v275
        %v277 = vpop.xlane.xlu0 %276
        %v278 = vsub.f32 1.0, %v270
        %v279 = vmax.f32 %v278, 0.0
        %v280 = vmul.f32 %v279, %v279
        %v281 = vsub.f32 0.0, %v277
        %v282 = vmul.f32 %v281, %v280
        %v283 = vmul.f32 %v282, %v268
        %s284 = sadd.s32 %s21, %s22
        %s285 = smul.u32 %s284, 8
        %v286 = vlaneseq
        %v287 = vshrl.u32 %v286, 7
        %v288 = vstv %s285
        %v289 = vadd.s32 %v288, %v287
        %vm290 = vcmp.lt.s32.totalorder %v289, 8
        %v291 = vsel %vm290, %v283, 0.0
        %v292 = vld [vmem:[%s215] sm:$0x1]
        %vm293 = vcmask 7168
        %v294 = vsel %vm293, %v291, 0.0
        %295 = vadd.xlane.f32.xlu0 %v294
        %v296 = vpop.xlane.xlu0 %295
        %v297 = vrot.slane %v296, 4
        %v298 = vadd.f32 %v296, %v297
        %v299 = vrot.slane %v298, 2
        %v300 = vadd.f32 %v298, %v299
        %v301 = vrot.slane %v300, 1
        %v302 = vadd.f32 %v300, %v301
        %s303 = vtos %v302
        %v304 = vstv %s303
        %v305 = vadd.f32 %v292, %v304
        %306 = vst [vmem:[%s215] sm:$0x1] %v305
        %s307 = sand.u32 %s122, 1
        %s308 = scalar_lea.sflag [#allocation3], %s307
        %s309 = sand.u32 %s122, 1
        %s310 = scalar_lea.vmem [#allocation2], %s309
        // Predicated region
        $region37: #{tpu_custom_call.1} parent=31 // pred_check
          %p311 = pneg %p132
        $region38: #{tpu_custom_call.1} parent=31 // pred_check_branch
          %313 = sbr.rel (%p311) target = $region40
        $region39: #{tpu_custom_call.1} parent=31 // pred_region
          %315 = vsyncadd %s308, 0
          %s316 = scalar_lea.hbm %s3, %s21
          %s318 = sshll.u32 %s310, 4
          %s319 = int_to_ptr.vmem [resolvable:$true] %s318
          %s320 = sshll.u32 %s316, 4
          %s321 = int_to_ptr.hbm [resolvable:$true] %s320
          %323 = dma.vmem_to_hbm [thread:$0]  %s319, 16, %s321, %s308
        $region40: #{tpu_custom_call.1} parent=31 // pred_fallthru
          _
      $region32: #{tpu_custom_call.1} parent=5 // pred_fallthru
        _
      %p324 = scmp.le.s32.totalorder 2, %s12
      // Predicated region
      $region41: #{tpu_custom_call.1} parent=5 // pred_check
        %p325 = pneg %p324
      $region42: #{tpu_custom_call.1} parent=5 // pred_check_branch
        %327 = sbr.rel (%p325) target = $region44
      $region43: #{tpu_custom_call.1} parent=5 // pred_region
        %s328 = ssub.s32 %s12, 2
        // Predicated region
        $region45: #{tpu_custom_call.1} parent=43 // pred_check
          %p329 = pneg %p138
        $region46: #{tpu_custom_call.1} parent=43 // pred_check_branch
          %331 = sbr.rel (%p329) target = $region48
        $region47: #{tpu_custom_call.1} parent=43 // pred_region
          %s332 = sand.u32 %s123, 1
          %s333 = scalar_lea.sflag [#allocation3], %s332
          %s334 = sand.u32 %s123, 1
          %s335 = scalar_lea.vmem [#allocation2], %s334
          %337 = dma.done %s333, 16
        $region48: #{tpu_custom_call.1} parent=43 // pred_fallthru
          _
      $region44: #{tpu_custom_call.1} parent=5 // pred_fallthru
        _
    $region6: #{tpu_custom_call.1} parent=1 // loop_footer
      %s16 = sadd.s32 1, %s12
    $region7: #{tpu_custom_call.1} parent=1 // loop_footer_branch
      %11 = sbr.rel target = $region3
    $region8: #{tpu_custom_call.1} parent=1 // loop_exit
      _
    %338 = vsyncpa [#allocation3], 1
    %s339 = scalar_lea.sflag [#allocation3], 1
    %340 = vsyncpa %s339, 1

</llo_original>
